<compile_context>
chip_gen: v6e
topology: v6e:2x2x1
jax: 0.10.0
libtpu: 0.0.40
codegen_flags: <defaults>
</compile_context>

<pallas_src>
import jax
import jax.numpy as jnp
from jax.experimental import pallas as pl
from jax.experimental.pallas import tpu as pltpu


def _round_up(x, m):
    return ((x + m - 1) // m) * m


def _pad_axis(x, axis, target):
    cur = x.shape[axis]
    if cur == target:
        return x
    pad = [(0, 0)] * x.ndim
    pad[axis] = (0, target - cur)
    return jnp.pad(x, pad)


def _score_chunk(d_ann):
    # Sublane chunk size (multiple of 8): ~16 chunks max keeps the unrolled loop
    # short while bounding per-chunk broadcast temporaries to a few vregs per row.
    return min(d_ann, max(8, _round_up(-(-d_ann // 16), 8)))


def _tpu_generation_params():
    """Returns (resident-block VMEM budget, vmem_limit_bytes, max batch-grid split)."""
    try:
        kind = jax.devices()[0].device_kind.lower()
    except Exception:
        kind = ""
    if ("v7" in kind) or ("7x" in kind) or ("tpu7" in kind):
        # v7x: 64 MiB VMEM, 2 TensorCores -> smaller budget, split batch >= 2 steps.
        return 20 * 1024 * 1024, 40 * 1024 * 1024, 2
    # v5e / v6e: 128 MiB VMEM, single TensorCore.
    return 48 * 1024 * 1024, 64 * 1024 * 1024, 1


def _choose_bm(b, d_ann, n, d_q_in, in_itemsize, out_itemsize, budget_bytes, max_grid_split):
    """Largest batch tile whose resident blocks + in-kernel temporaries fit the budget."""
    chunk = _score_chunk(d_ann)
    per_row = 2 * d_ann * n * in_itemsize           # annotation block (double-buffered)
    per_row += 2 * d_q_in * in_itemsize             # query block (double-buffered)
    per_row += 2 * (d_ann + n) * out_itemsize       # ctx / attn output blocks (double-buffered)
    per_row += 4 * (4 * n + 2 * d_ann + d_q_in)     # f32 temporaries (scores/p/attn/qp/ctx)
    per_row += 2 * 4 * chunk * n                    # per-chunk broadcast products (f32)
    bm = int(budget_bytes // max(per_row, 1))
    bm = max(8, (min(bm, 1024) // 8) * 8)
    if max_grid_split > 1:
        # Keep >= max_grid_split grid steps so both v7x TensorCores get work.
        bm = min(bm, max(8, _round_up(-(-b // max_grid_split), 8)))
    if bm >= b:
        return b                                    # full-extent batch block (legal for any b)
    return bm


def _attention_core(qp, ann_ref):
    """qp: (BM, >=d_ann) f32 projected queries; ann_ref: Ref[(BM, d_ann, N)].

    Returns (ctx (BM, d_ann) f32, attn (BM, N) f32). The d_ann reduction is tiled
    in sublane chunks so the broadcast products stay small (per-chunk f32 cast,
    f32 accumulation); the annotation block is never copied/cast wholesale.
    """
    bm = qp.shape[0]
    _, d_ann, n = ann_ref.shape
    chunk = _score_chunk(d_ann)

    # scores[b, j] = sum_d qp[b, d] * ann[b, d, j]   (VPU mul + sublane reduce)
    scores = jnp.zeros((bm, n), jnp.float32)
    for s in range(0, d_ann, chunk):
        w = min(chunk, d_ann - s)
        a = ann_ref[:, s:s + w, :].astype(jnp.float32)          # (bm, w, n) per-chunk cast
        scores = scores + jnp.sum(qp[:, s:s + w, None] * a, axis=1)

    # Row-local softmax in f32; reciprocal on the EUP + one Newton step.
    m = jnp.max(scores, axis=-1, keepdims=True)
    p = jnp.exp(scores - m)
    l = jnp.sum(p, axis=-1, keepdims=True)
    inv = pl.reciprocal(l, approx=True)
    inv = inv * (2.0 - l * inv)
    attn = p * inv                                              # (bm, n)

    # ctx[b, d] = sum_j attn[b, j] * ann[b, d, j]    (VPU mul + lane reduce)
    ctx_chunks = []
    for s in range(0, d_ann, chunk):
        w = min(chunk, d_ann - s)
        a = ann_ref[:, s:s + w, :].astype(jnp.float32)
        ctx_chunks.append(jnp.sum(attn[:, None, :] * a, axis=-1))   # (bm, w)
    ctx = ctx_chunks[0] if len(ctx_chunks) == 1 else jnp.concatenate(ctx_chunks, axis=1)
    return ctx, attn


def _global_attn_fc_kernel(q_ref, wt_ref, b_ref, ann_ref, ctx_ref, attn_ref):
    # (BM, d_q_pad) @ (d_q_pad, d_ann_pad) on the MXU; the zero-padded weight/bias
    # columns make qp[:, d_ann:] exactly zero and they are simply never read below.
    qp = jnp.dot(q_ref[...], wt_ref[...], preferred_element_type=jnp.float32)
    qp = qp + b_ref[...].astype(jnp.float32)
    ctx, attn = _attention_core(qp, ann_ref)
    ctx_ref[...] = ctx.astype(ctx_ref.dtype)
    attn_ref[...] = attn.astype(attn_ref.dtype)


def _global_attn_nofc_kernel(q_ref, ann_ref, ctx_ref, attn_ref):
    qp = q_ref[...].astype(jnp.float32)
    ctx, attn = _attention_core(qp, ann_ref)
    ctx_ref[...] = ctx.astype(ctx_ref.dtype)
    attn_ref[...] = attn.astype(attn_ref.dtype)


def global_attention(queries, annotations, fc_weight=None, fc_bias=None):
    """Pallas GlobalAttention forward.

    queries     : (B, d_query)
    annotations : (B, d_annotations, N)   (channels-first, as in the PyTorch module)
    fc_weight   : (d_annotations, d_query) or None (None <=> module has no fc layer)
    fc_bias     : (d_annotations,) or None
    returns (contexts (B, d_annotations), attn_weights (B, N))
    """
    B, d_q = queries.shape
    ann_b, d_ann, N = annotations.shape
    assert ann_b == B
    use_fc = fc_weight is not None          # key off the weight, not the shapes
    if not use_fc:
        assert d_q == d_ann, "without an fc layer, d_query must equal d_annotations"
    out_dtype = queries.dtype
    out_itemsize = jnp.dtype(out_dtype).itemsize

    budget, vmem_limit, max_grid_split = _tpu_generation_params()
    if use_fc:
        # Tiny FC operands get MXU-friendly 128-multiple padding (zero-pad -> exact result).
        d_q_pad = _round_up(d_q, 128)
        d_ann_pad = _round_up(d_ann, 128)
        budget = max(budget - 2 * (d_q_pad * d_ann_pad + d_ann_pad) * 4, budget // 2)
        d_q_in = d_q_pad
    else:
        d_q_in = d_ann

    BM = _choose_bm(B, d_ann, N, d_q_in, annotations.dtype.itemsize, out_itemsize,
                    budget, max_grid_split)
    grid = (pl.cdiv(B, BM),)

    out_shapes = (
        jax.ShapeDtypeStruct((B, d_ann), out_dtype),
        jax.ShapeDtypeStruct((B, N), out_dtype),
    )
    out_specs = (
        pl.BlockSpec((BM, d_ann), lambda i: (i, 0)),
        pl.BlockSpec((BM, N), lambda i: (i, 0)),
    )
    # Annotations: NO host padding/copy; full-extent minor dims (block dim == array dim).
    ann_spec = pl.BlockSpec((BM, d_ann, N), lambda i: (i, 0, 0))

    flops = 4 * B * d_ann * N + (2 * B * d_q * d_ann if use_fc else 0)
    cost = pl.CostEstimate(
        flops=flops,
        transcendentals=B * (N + 1),
        bytes_accessed=int(
            annotations.size * annotations.dtype.itemsize
            + B * d_q_in * queries.dtype.itemsize
            + (B * d_ann + B * N) * out_itemsize
            + ((d_q_pad * d_ann_pad + d_ann_pad) * 4 if use_fc else 0)
        ),
    )
    cparams = pltpu.CompilerParams(
        dimension_semantics=("parallel",),   # batch tiles shard across TCs on v7x
        vmem_limit_bytes=vmem_limit,
    )

    if use_fc:
        assert fc_bias is not None
        wt = _pad_axis(_pad_axis(fc_weight.T, 0, d_q_pad), 1, d_ann_pad)   # (d_q_pad, d_ann_pad)
        bias2d = _pad_axis(fc_bias.reshape(1, d_ann), 1, d_ann_pad)        # (1, d_ann_pad)
        q_in = _pad_axis(queries, 1, d_q_pad)                              # queries are tiny
        fn = pl.pallas_call(
            _global_attn_fc_kernel,
            out_shape=out_shapes,
            grid_spec=pltpu.PrefetchScalarGridSpec(
                num_scalar_prefetch=0,
                grid=grid,
                in_specs=[
                    pl.BlockSpec((BM, d_q_pad), lambda i: (i, 0)),
                    pl.BlockSpec((d_q_pad, d_ann_pad), lambda i: (0, 0)),  # weight stays resident
                    pl.BlockSpec((1, d_ann_pad), lambda i: (0, 0)),        # bias stays resident
                    ann_spec,
                ],
                out_specs=out_specs,
            ),
            compiler_params=cparams,
            cost_estimate=cost,
        )
        ctx, attn = fn(q_in, wt, bias2d, annotations)
    else:
        fn = pl.pallas_call(
            _global_attn_nofc_kernel,
            out_shape=out_shapes,
            grid_spec=pltpu.PrefetchScalarGridSpec(
                num_scalar_prefetch=0,
                grid=grid,
                in_specs=[pl.BlockSpec((BM, d_ann), lambda i: (i, 0)), ann_spec],
                out_specs=out_specs,
            ),
            compiler_params=cparams,
            cost_estimate=cost,
        )
        ctx, attn = fn(queries, annotations)

    # TODO(synk): PyTorch .squeeze() also drops the batch dim when B == 1; we always
    # return (B, ...), which matches the module for B > 1.
    return ctx, attn


def _reference(queries, annotations, fc_weight=None, fc_bias=None):
    # Plain-JAX reference mirroring the PyTorch forward.
    if fc_weight is not None:
        queries = queries @ fc_weight.T + fc_bias
    scores = jnp.einsum("bd,bdn->bn", queries, annotations)
    attn = jax.nn.softmax(scores, axis=-1)
    ctx = jnp.einsum("bn,bdn->bd", attn, annotations)
    return ctx, attn


if __name__ == "__main__":
    key = jax.random.PRNGKey(0)
    keys = jax.random.split(key, 10)

    # --- FC path: d_query != d_annotations ---
    B, d_query, d_annotations, num_annotations = 2, 16, 32, 64
    queries = jax.random.normal(keys[0], (B, d_query), dtype=jnp.float32)
    annotations = jax.random.normal(keys[1], (B, d_annotations, num_annotations), dtype=jnp.float32)
    bound = 1.0 / (d_query ** 0.5)
    fc_weight = jax.random.uniform(keys[2], (d_annotations, d_query),
                                   minval=-bound, maxval=bound, dtype=jnp.float32)
    fc_bias = jax.random.uniform(keys[3], (d_annotations,),
                                 minval=-bound, maxval=bound, dtype=jnp.float32)

    contexts, attn_weights = global_attention(queries, annotations, fc_weight, fc_bias)
    contexts = jax.block_until_ready(contexts)
    attn_weights = jax.block_until_ready(attn_weights)
    ref_ctx, ref_attn = _reference(queries, annotations, fc_weight, fc_bias)
    assert contexts.shape == (B, d_annotations)
    assert attn_weights.shape == (B, num_annotations)
    assert jnp.allclose(contexts, ref_ctx, atol=1e-4, rtol=1e-4)
    assert jnp.allclose(attn_weights, ref_attn, atol=1e-4, rtol=1e-4)

    # --- no-FC path: d_query == d_annotations ---
    queries2 = jax.random.normal(keys[4], (B, d_annotations), dtype=jnp.float32)
    annotations2 = jax.random.normal(keys[5], (B, d_annotations, num_annotations), dtype=jnp.float32)
    ctx2, attn2 = global_attention(queries2, annotations2)
    ctx2 = jax.block_until_ready(ctx2)
    attn2 = jax.block_until_ready(attn2)
    ref_ctx2, ref_attn2 = _reference(queries2, annotations2)
    assert jnp.allclose(ctx2, ref_ctx2, atol=1e-4, rtol=1e-4)
    assert jnp.allclose(attn2, ref_attn2, atol=1e-4, rtol=1e-4)

    # --- awkward, non-128-aligned shapes (exercise full-extent blocks + remainder chunk) ---
    B3, dq3, da3, n3 = 4, 12, 36, 50
    q3 = jax.random.normal(keys[6], (B3, dq3), dtype=jnp.float32)
    a3 = jax.random.normal(keys[7], (B3, da3, n3), dtype=jnp.float32)
    b3 = 1.0 / (dq3 ** 0.5)
    w3 = jax.random.uniform(keys[8], (da3, dq3), minval=-b3, maxval=b3, dtype=jnp.float32)
    bias3 = jax.random.uniform(keys[9], (da3,), minval=-b3, maxval=b3, dtype=jnp.float32)
    ctx3, attn3 = global_attention(q3, a3, w3, bias3)
    ctx3 = jax.block_until_ready(ctx3)
    attn3 = jax.block_until_ready(attn3)
    rctx3, rattn3 = _reference(q3, a3, w3, bias3)
    assert jnp.allclose(ctx3, rctx3, atol=1e-4, rtol=1e-4)
    assert jnp.allclose(attn3, rattn3, atol=1e-4, rtol=1e-4)

    print("KERNEL_OK")
</pallas_src>

<mosaic_0001>
module attributes {stable_mosaic.version = 11 : i64} {
  func.func @_global_attn_fc_kernel(%arg0: i32, %arg1: memref<2x128xf32, #tpu.memory_space<vmem>>, %arg2: memref<128x128xf32, #tpu.memory_space<vmem>>, %arg3: memref<1x128xf32, #tpu.memory_space<vmem>>, %arg4: memref<2x32x64xf32, #tpu.memory_space<vmem>>, %arg5: memref<2x32xf32, #tpu.memory_space<vmem>>, %arg6: memref<2x64xf32, #tpu.memory_space<vmem>>) attributes {dimension_semantics = [#tpu.dimension_semantics<parallel>], iteration_bounds = array<i64: 1>, scalar_prefetch = 0 : i64, scratch_operands = 0 : i64, tpu.core_type = #tpu.core_type<tc>, window_params = [{transform_indices = @transform_0, window_bounds = array<i64: 2, 128>}, {pipeline_mode = #tpu.pipeline_mode<synchronous>, transform_indices = @transform_1, window_bounds = array<i64: 128, 128>}, {pipeline_mode = #tpu.pipeline_mode<synchronous>, transform_indices = @transform_2, window_bounds = array<i64: 1, 128>}, {transform_indices = @transform_3, window_bounds = array<i64: 2, 32, 64>}, {transform_indices = @transform_4, window_bounds = array<i64: 2, 32>}, {transform_indices = @transform_5, window_bounds = array<i64: 2, 64>}]} {
    %c0 = arith.constant 0 : index
    %c0_0 = arith.constant 0 : index
    %0 = vector.load %arg1[%c0, %c0_0] : memref<2x128xf32, #tpu.memory_space<vmem>>, vector<2x128xf32>
    %c0_1 = arith.constant 0 : index
    %c0_2 = arith.constant 0 : index
    %1 = vector.load %arg2[%c0_1, %c0_2] : memref<128x128xf32, #tpu.memory_space<vmem>>, vector<128x128xf32>
    %cst = arith.constant dense<0.000000e+00> : vector<2x128xf32>
    %2 = tpu.matmul %0, %1, %cst {dimension_numbers = #tpu.dot_dimension_numbers<[1], [0], [0], [1], [0, 0, 1, 1], [], []>} : vector<2x128xf32>, vector<128x128xf32>, vector<2x128xf32> -> vector<2x128xf32>
    %c0_3 = arith.constant 0 : index
    %c0_4 = arith.constant 0 : index
    %3 = vector.load %arg3[%c0_3, %c0_4] : memref<1x128xf32, #tpu.memory_space<vmem>>, vector<1x128xf32>
    %4 = vector.broadcast %3 : vector<1x128xf32> to vector<2x128xf32>
    %5 = arith.addf %2, %4 : vector<2x128xf32>
    %cst_5 = arith.constant 0.000000e+00 : f32
    %6 = vector.broadcast %cst_5 : f32 to vector<2x64xf32>
    %c0_6 = arith.constant 0 : index
    %c0_7 = arith.constant 0 : index
    %c0_8 = arith.constant 0 : index
    %7 = vector.load %arg4[%c0_6, %c0_7, %c0_8] : memref<2x32x64xf32, #tpu.memory_space<vmem>>, vector<2x8x64xf32>
    %8 = vector.extract_strided_slice %5 {offsets = [0, 0], sizes = [2, 8], strides = [1, 1]} : vector<2x128xf32> to vector<2x8xf32>
    %9 = vector.shape_cast %8 : vector<2x8xf32> to vector<2x8x1xf32>
    %10 = vector.broadcast %9 : vector<2x8x1xf32> to vector<2x8x64xf32>
    %11 = arith.mulf %10, %7 : vector<2x8x64xf32>
    %cst_9 = arith.constant dense<0.000000e+00> : vector<2x64xf32>
    %12 = vector.multi_reduction <add>, %11, %cst_9 [1] : vector<2x8x64xf32> to vector<2x64xf32>
    %13 = arith.addf %6, %12 : vector<2x64xf32>
    %c0_10 = arith.constant 0 : index
    %c8 = arith.constant 8 : index
    %c0_11 = arith.constant 0 : index
    %14 = vector.load %arg4[%c0_10, %c8, %c0_11] : memref<2x32x64xf32, #tpu.memory_space<vmem>>, vector<2x8x64xf32>
    %15 = vector.extract_strided_slice %5 {offsets = [0, 8], sizes = [2, 8], strides = [1, 1]} : vector<2x128xf32> to vector<2x8xf32>
    %16 = vector.shape_cast %15 : vector<2x8xf32> to vector<2x8x1xf32>
    %17 = vector.broadcast %16 : vector<2x8x1xf32> to vector<2x8x64xf32>
    %18 = arith.mulf %17, %14 : vector<2x8x64xf32>
    %cst_12 = arith.constant dense<0.000000e+00> : vector<2x64xf32>
    %19 = vector.multi_reduction <add>, %18, %cst_12 [1] : vector<2x8x64xf32> to vector<2x64xf32>
    %20 = arith.addf %13, %19 : vector<2x64xf32>
    %c0_13 = arith.constant 0 : index
    %c16 = arith.constant 16 : index
    %c0_14 = arith.constant 0 : index
    %21 = vector.load %arg4[%c0_13, %c16, %c0_14] : memref<2x32x64xf32, #tpu.memory_space<vmem>>, vector<2x8x64xf32>
    %22 = vector.extract_strided_slice %5 {offsets = [0, 16], sizes = [2, 8], strides = [1, 1]} : vector<2x128xf32> to vector<2x8xf32>
    %23 = vector.shape_cast %22 : vector<2x8xf32> to vector<2x8x1xf32>
    %24 = vector.broadcast %23 : vector<2x8x1xf32> to vector<2x8x64xf32>
    %25 = arith.mulf %24, %21 : vector<2x8x64xf32>
    %cst_15 = arith.constant dense<0.000000e+00> : vector<2x64xf32>
    %26 = vector.multi_reduction <add>, %25, %cst_15 [1] : vector<2x8x64xf32> to vector<2x64xf32>
    %27 = arith.addf %20, %26 : vector<2x64xf32>
    %c0_16 = arith.constant 0 : index
    %c24 = arith.constant 24 : index
    %c0_17 = arith.constant 0 : index
    %28 = vector.load %arg4[%c0_16, %c24, %c0_17] : memref<2x32x64xf32, #tpu.memory_space<vmem>>, vector<2x8x64xf32>
    %29 = vector.extract_strided_slice %5 {offsets = [0, 24], sizes = [2, 8], strides = [1, 1]} : vector<2x128xf32> to vector<2x8xf32>
    %30 = vector.shape_cast %29 : vector<2x8xf32> to vector<2x8x1xf32>
    %31 = vector.broadcast %30 : vector<2x8x1xf32> to vector<2x8x64xf32>
    %32 = arith.mulf %31, %28 : vector<2x8x64xf32>
    %cst_18 = arith.constant dense<0.000000e+00> : vector<2x64xf32>
    %33 = vector.multi_reduction <add>, %32, %cst_18 [1] : vector<2x8x64xf32> to vector<2x64xf32>
    %34 = arith.addf %27, %33 : vector<2x64xf32>
    %cst_19 = arith.constant dense<0xFF800000> : vector<2xf32>
    %35 = vector.multi_reduction <maximumf>, %34, %cst_19 [1] : vector<2x64xf32> to vector<2xf32>
    %36 = vector.shape_cast %35 : vector<2xf32> to vector<2x1xf32>
    %37 = vector.broadcast %36 : vector<2x1xf32> to vector<2x64xf32>
    %38 = arith.subf %34, %37 : vector<2x64xf32>
    %39 = math.exp %38 : vector<2x64xf32>
    %cst_20 = arith.constant dense<0.000000e+00> : vector<2xf32>
    %40 = vector.multi_reduction <add>, %39, %cst_20 [1] : vector<2x64xf32> to vector<2xf32>
    %41 = vector.shape_cast %40 : vector<2xf32> to vector<2x1xf32>
    %42 = tpu.reciprocal %41 {approx = true} : vector<2x1xf32> -> vector<2x1xf32>
    %43 = arith.mulf %41, %42 : vector<2x1xf32>
    %cst_21 = arith.constant 2.000000e+00 : f32
    %44 = vector.broadcast %cst_21 : f32 to vector<2x1xf32>
    %45 = arith.subf %44, %43 : vector<2x1xf32>
    %46 = arith.mulf %42, %45 : vector<2x1xf32>
    %47 = vector.broadcast %46 : vector<2x1xf32> to vector<2x64xf32>
    %48 = arith.mulf %39, %47 : vector<2x64xf32>
    %c0_22 = arith.constant 0 : index
    %c0_23 = arith.constant 0 : index
    %c0_24 = arith.constant 0 : index
    %49 = vector.load %arg4[%c0_22, %c0_23, %c0_24] : memref<2x32x64xf32, #tpu.memory_space<vmem>>, vector<2x8x64xf32>
    %50 = vector.shape_cast %48 : vector<2x64xf32> to vector<2x1x64xf32>
    %51 = vector.broadcast %50 : vector<2x1x64xf32> to vector<2x8x64xf32>
    %52 = arith.mulf %51, %49 : vector<2x8x64xf32>
    %cst_25 = arith.constant dense<0.000000e+00> : vector<2x8xf32>
    %53 = vector.multi_reduction <add>, %52, %cst_25 [2] : vector<2x8x64xf32> to vector<2x8xf32>
    %c0_26 = arith.constant 0 : index
    %c8_27 = arith.constant 8 : index
    %c0_28 = arith.constant 0 : index
    %54 = vector.load %arg4[%c0_26, %c8_27, %c0_28] : memref<2x32x64xf32, #tpu.memory_space<vmem>>, vector<2x8x64xf32>
    %55 = vector.shape_cast %48 : vector<2x64xf32> to vector<2x1x64xf32>
    %56 = vector.broadcast %55 : vector<2x1x64xf32> to vector<2x8x64xf32>
    %57 = arith.mulf %56, %54 : vector<2x8x64xf32>
    %cst_29 = arith.constant dense<0.000000e+00> : vector<2x8xf32>
    %58 = vector.multi_reduction <add>, %57, %cst_29 [2] : vector<2x8x64xf32> to vector<2x8xf32>
    %c0_30 = arith.constant 0 : index
    %c16_31 = arith.constant 16 : index
    %c0_32 = arith.constant 0 : index
    %59 = vector.load %arg4[%c0_30, %c16_31, %c0_32] : memref<2x32x64xf32, #tpu.memory_space<vmem>>, vector<2x8x64xf32>
    %60 = vector.shape_cast %48 : vector<2x64xf32> to vector<2x1x64xf32>
    %61 = vector.broadcast %60 : vector<2x1x64xf32> to vector<2x8x64xf32>
    %62 = arith.mulf %61, %59 : vector<2x8x64xf32>
    %cst_33 = arith.constant dense<0.000000e+00> : vector<2x8xf32>
    %63 = vector.multi_reduction <add>, %62, %cst_33 [2] : vector<2x8x64xf32> to vector<2x8xf32>
    %c0_34 = arith.constant 0 : index
    %c24_35 = arith.constant 24 : index
    %c0_36 = arith.constant 0 : index
    %64 = vector.load %arg4[%c0_34, %c24_35, %c0_36] : memref<2x32x64xf32, #tpu.memory_space<vmem>>, vector<2x8x64xf32>
    %65 = vector.shape_cast %48 : vector<2x64xf32> to vector<2x1x64xf32>
    %66 = vector.broadcast %65 : vector<2x1x64xf32> to vector<2x8x64xf32>
    %67 = arith.mulf %66, %64 : vector<2x8x64xf32>
    %cst_37 = arith.constant dense<0.000000e+00> : vector<2x8xf32>
    %68 = vector.multi_reduction <add>, %67, %cst_37 [2] : vector<2x8x64xf32> to vector<2x8xf32>
    %69 = tpu.concatenate %53, %58, %63, %68 in 1 : vector<2x8xf32>, vector<2x8xf32>, vector<2x8xf32>, vector<2x8xf32> -> vector<2x32xf32>
    %c0_38 = arith.constant 0 : index
    %c0_39 = arith.constant 0 : index
    %70 = vector.load %arg5[%c0_38, %c0_39] : memref<2x32xf32, #tpu.memory_space<vmem>>, vector<2x32xf32>
    tpu.vector_store %arg5[%c0_38, %c0_39], %69 {strides = array<i32>} : memref<2x32xf32, #tpu.memory_space<vmem>>, vector<2x32xf32>,
    %c0_40 = arith.constant 0 : index
    %c0_41 = arith.constant 0 : index
    %71 = vector.load %arg6[%c0_40, %c0_41] : memref<2x64xf32, #tpu.memory_space<vmem>>, vector<2x64xf32>
    tpu.vector_store %arg6[%c0_40, %c0_41], %48 {strides = array<i32>} : memref<2x64xf32, #tpu.memory_space<vmem>>, vector<2x64xf32>,
    return
  }
  func.func @transform_0(%arg0: i32) -> (i32, i32) {
    %c0_i32 = arith.constant 0 : i32
    %c0_i32_0 = arith.constant 0 : i32
    return %arg0, %c0_i32 : i32, i32
  }
  func.func @transform_1(%arg0: i32) -> (i32, i32) {
    %c0_i32 = arith.constant 0 : i32
    %c0_i32_0 = arith.constant 0 : i32
    %c0_i32_1 = arith.constant 0 : i32
    return %c0_i32, %c0_i32_0 : i32, i32
  }
  func.func @transform_2(%arg0: i32) -> (i32, i32) {
    %c0_i32 = arith.constant 0 : i32
    %c0_i32_0 = arith.constant 0 : i32
    %c0_i32_1 = arith.constant 0 : i32
    return %c0_i32, %c0_i32_0 : i32, i32
  }
  func.func @transform_3(%arg0: i32) -> (i32, i32, i32) {
    %c0_i32 = arith.constant 0 : i32
    %c0_i32_0 = arith.constant 0 : i32
    %c0_i32_1 = arith.constant 0 : i32
    return %arg0, %c0_i32, %c0_i32_0 : i32, i32, i32
  }
  func.func @transform_4(%arg0: i32) -> (i32, i32) {
    %c0_i32 = arith.constant 0 : i32
    %c0_i32_0 = arith.constant 0 : i32
    return %arg0, %c0_i32 : i32, i32
  }
  func.func @transform_5(%arg0: i32) -> (i32, i32) {
    %c0_i32 = arith.constant 0 : i32
    %c0_i32_0 = arith.constant 0 : i32
    return %arg0, %c0_i32 : i32, i32
  }
}

</mosaic_0001>

<llo_original>
// kernel: tpu_custom_call.1
$region0: #{tpu_custom_call.1}
  #allocation0 [shape = 'u32[]', space=smem, size = 0x4, offset = 0x4, fixed_abs, tag = 'smem constant byte address 0x4 - core index']
  #allocation1 [shape = 'u32[144,128]{1,0:T(1,128)}', space=vmem, size = 0x12000, scoped, tag = 'internal scratch']
  %s0 = inlined_call_operand.hbm [shape: f32[2,128], index: 0, kind: input, shape index: {}]
  %s1 = inlined_call_operand.hbm [shape: f32[128,128], index: 1, kind: input, shape index: {}]
  %s2 = inlined_call_operand.vmem [shape: f32[1,128], index: 2, kind: input, shape index: {}]
  %s3 = inlined_call_operand.hbm [shape: f32[2,32,64], index: 3, kind: input, shape index: {}]
  %s4 = inlined_call_operand.hbm [shape: f32[2,32], index: 4, kind: output, shape index: {0}]
  %s5 = inlined_call_operand.hbm [shape: f32[2,64], index: 5, kind: output, shape index: {1}]
  %6 = xla_tuple %s4, %s5
  %s7 = sld [smem:[#allocation0]]
  $region46: #{tpu_custom_call.1} parent=0
    _
  %s9 = ssub.s32 1, %s7
  %s10 = scalar_select 0, %s9, %s7
  $region1: #{tpu_custom_call.1} parent=0
    #allocation2 [shape = 'u8[1024]{0}', space=vmem, size = 0x400, scoped, tag = 'input window, operand 0, single buffered']
    #allocation3 [shape = 's32[1]{0}', space=sflag, size = 0x4, scoped, tag = 'scoped memory for tpu_custom_call.1']
    #allocation4 [shape = 's32[1]{0}', space=sflag, size = 0x4, scoped, tag = 'scoped memory for tpu_custom_call.1']
    #allocation5 [shape = 'u8[65536]{0}', space=vmem, size = 0x10000, scoped, tag = 'input window, operand 1, single buffered']
    #allocation6 [shape = 's32[1]{0}', space=sflag, size = 0x4, scoped, tag = 'scoped memory for tpu_custom_call.1']
    #allocation7 [shape = 'u8[32768]{0}', space=vmem, size = 0x8000, scoped, tag = 'input window, operand 3, single buffered']
    #allocation8 [shape = 'u8[1024]{0}', space=vmem, size = 0x400, scoped, tag = 'output window, operand 0, single buffered']
    #allocation9 [shape = 'u8[1024]{0}', space=vmem, size = 0x400, scoped, tag = 'output window, operand 1, single buffered']
    #allocation10 [shape = 's32[1]{0}', space=sflag, size = 0x4, scoped, tag = 'scoped memory for tpu_custom_call.1']
    %11 = vsyncpa [#allocation3], 0
    %12 = vsyncpa [#allocation6], 0
    %13 = vsyncpa [#allocation4], 0
    %14 = vsyncpa [#allocation10], 0
    // Predicated region
    $region2: #{tpu_custom_call.1} parent=1 // pred_check
      _
    $region3: #{tpu_custom_call.1} parent=1 // pred_check_branch
      %16 = sbr.rel (0) target = $region5
    $region4: #{tpu_custom_call.1} parent=1 // pred_region
      %s18 = ssub.s32 32, 32
      %19 = vsyncadd [#allocation3], %s18
      %s21 = sshll.u32 [#allocation2], 4
      %s22 = int_to_ptr.vmem [resolvable:$true] %s21
      %24 = dma.hbm_to_vmem [thread:$0]  %s0, 32, %s22, [#allocation3]
    $region5: #{tpu_custom_call.1} parent=1 // pred_fallthru
      _
    // Predicated region
    $region6: #{tpu_custom_call.1} parent=1 // pred_check
      _
    $region7: #{tpu_custom_call.1} parent=1 // pred_check_branch
      %26 = sbr.rel (0) target = $region9
    $region8: #{tpu_custom_call.1} parent=1 // pred_region
      %s28 = ssub.s32 2048, 2048
      %29 = vsyncadd [#allocation6], %s28
      %s30 = sshll.u32 [#allocation5], 4
      %s31 = int_to_ptr.vmem [resolvable:$true] %s30
      %36 = dma.hbm_to_vmem [thread:$0]  %s1, 2048, %s31, [#allocation6], 128, 128, 8
    $region9: #{tpu_custom_call.1} parent=1 // pred_fallthru
      _
    // Predicated region
    $region10: #{tpu_custom_call.1} parent=1 // pred_check
      _
    $region11: #{tpu_custom_call.1} parent=1 // pred_check_branch
      %38 = sbr.rel (0) target = $region13
    $region12: #{tpu_custom_call.1} parent=1 // pred_region
      _
    $region13: #{tpu_custom_call.1} parent=1 // pred_fallthru
      _
    // Predicated region
    $region14: #{tpu_custom_call.1} parent=1 // pred_check
      _
    $region15: #{tpu_custom_call.1} parent=1 // pred_check_branch
      %40 = sbr.rel (0) target = $region17
    $region16: #{tpu_custom_call.1} parent=1 // pred_region
      %s42 = ssub.s32 1024, 1024
      %43 = vsyncadd [#allocation6], %s42
      %s44 = sshll.u32 [#allocation7], 4
      %s45 = int_to_ptr.vmem [resolvable:$true] %s44
      %50 = dma.hbm_to_vmem [thread:$0]  %s3, 1024, %s45, [#allocation6], 128, 128, 8
    $region17: #{tpu_custom_call.1} parent=1 // pred_fallthru
      _
    // Predicated region
    $region18: #{tpu_custom_call.1} parent=1 // pred_check
      _
    $region19: #{tpu_custom_call.1} parent=1 // pred_check_branch
      %52 = sbr.rel (0) target = $region21
    $region20: #{tpu_custom_call.1} parent=1 // pred_region
      %53 = dma.done [#allocation3], 32
    $region21: #{tpu_custom_call.1} parent=1 // pred_fallthru
      _
    // Predicated region
    $region22: #{tpu_custom_call.1} parent=1 // pred_check
      _
    $region23: #{tpu_custom_call.1} parent=1 // pred_check_branch
      %55 = sbr.rel (0) target = $region25
    $region24: #{tpu_custom_call.1} parent=1 // pred_region
      %56 = dma.done [#allocation6], 2048
    $region25: #{tpu_custom_call.1} parent=1 // pred_fallthru
      _
    // Predicated region
    $region26: #{tpu_custom_call.1} parent=1 // pred_check
      _
    $region27: #{tpu_custom_call.1} parent=1 // pred_check_branch
      %58 = sbr.rel (0) target = $region29
    $region28: #{tpu_custom_call.1} parent=1 // pred_region
      %59 = dma.done [#allocation6], 1024
    $region29: #{tpu_custom_call.1} parent=1 // pred_fallthru
      _
    %v60 = vld [vmem:[#allocation2] sm:$0x3]
    %v61 = vld [vmem:[#allocation5] sm:$0xff]
    %v62 = vld [vmem:[#allocation5 + $0x8] sm:$0xff]
    %v63 = vld [vmem:[#allocation5 + $0x10] sm:$0xff]
    %v64 = vld [vmem:[#allocation5 + $0x18] sm:$0xff]
    %v65 = vld [vmem:[#allocation5 + $0x20] sm:$0xff]
    %v66 = vld [vmem:[#allocation5 + $0x28] sm:$0xff]
    %v67 = vld [vmem:[#allocation5 + $0x30] sm:$0xff]
    %v68 = vld [vmem:[#allocation5 + $0x38] sm:$0xff]
    %v69 = vld [vmem:[#allocation5 + $0x40] sm:$0xff]
    %v70 = vld [vmem:[#allocation5 + $0x48] sm:$0xff]
    %v71 = vld [vmem:[#allocation5 + $0x50] sm:$0xff]
    %v72 = vld [vmem:[#allocation5 + $0x58] sm:$0xff]
    %v73 = vld [vmem:[#allocation5 + $0x60] sm:$0xff]
    %v74 = vld [vmem:[#allocation5 + $0x68] sm:$0xff]
    %v75 = vld [vmem:[#allocation5 + $0x70] sm:$0xff]
    %v76 = vld [vmem:[#allocation5 + $0x78] sm:$0xff]
    %v77 = vld [vmem:[%s2] sm:$0x1]
    %v79 = vlaneseq
    %v80 = vshrl.u32 %v79, 7
    %v81 = vsub.s32 0, %v80
    %v82 = vrot.slane %v77, %v81
    %84 = vmatprep.subr.mxu0 0.0
    %85 = vmatpush1.msra.mxu0 %v76
    %86 = vmatprep.subr.mxu0 0.0
    %87 = vmatpush1.msra.mxu0 %v75
    %88 = vmatprep.subr.mxu0 0.0
    %89 = vmatpush1.msra.mxu0 %v74
    %90 = vmatprep.subr.mxu0 0.0
    %91 = vmatpush1.msra.mxu0 %v73
    %92 = vmatprep.subr.mxu0 0.0
    %93 = vmatpush1.msra.mxu0 %v72
    %94 = vmatprep.subr.mxu0 0.0
    %95 = vmatpush1.msra.mxu0 %v71
    %96 = vmatprep.subr.mxu0 0.0
    %97 = vmatpush1.msra.mxu0 %v70
    %98 = vmatprep.subr.mxu0 0.0
    %99 = vmatpush1.msra.mxu0 %v69
    %100 = vmatprep.subr.mxu0 0.0
    %101 = vmatpush1.msra.mxu0 %v68
    %102 = vmatprep.subr.mxu0 0.0
    %103 = vmatpush1.msra.mxu0 %v67
    %104 = vmatprep.subr.mxu0 0.0
    %105 = vmatpush1.msra.mxu0 %v66
    %106 = vmatprep.subr.mxu0 0.0
    %107 = vmatpush1.msra.mxu0 %v65
    %108 = vmatprep.subr.mxu0 0.0
    %109 = vmatpush1.msra.mxu0 %v64
    %110 = vmatprep.subr.mxu0 0.0
    %111 = vmatpush1.msra.mxu0 %v63
    %112 = vmatprep.subr.mxu0 0.0
    %113 = vmatpush1.msra.mxu0 %v62
    %114 = vmatprep.subr.mxu0 0.0
    %115 = vmatpush1.msra.mxu0 %v61
    %116 = vmatprep.subr.mxu0 0.0
    %117 = vmatpush2.msra.mxu0 0.0
    %118 = vmatprep.subr.mxu0 0.0
    %119 = vmatpush2.msra.mxu0 0.0
    %120 = vmatprep.subr.mxu0 0.0
    %121 = vmatpush2.msra.mxu0 0.0
    %122 = vmatprep.subr.mxu0 0.0
    %123 = vmatpush2.msra.mxu0 0.0
    %124 = vmatprep.subr.mxu0 0.0
    %125 = vmatpush2.msra.mxu0 0.0
    %126 = vmatprep.subr.mxu0 0.0
    %127 = vmatpush2.msra.mxu0 0.0
    %128 = vmatprep.subr.mxu0 0.0
    %129 = vmatpush2.msra.mxu0 0.0
    %130 = vmatprep.subr.mxu0 0.0
    %131 = vmatpush2.msra.mxu0 0.0
    %132 = vmatprep.subr.mxu0 0.0
    %133 = vmatpush2.msra.mxu0 0.0
    %134 = vmatprep.subr.mxu0 0.0
    %135 = vmatpush2.msra.mxu0 0.0
    %136 = vmatprep.subr.mxu0 0.0
    %137 = vmatpush2.msra.mxu0 0.0
    %138 = vmatprep.subr.mxu0 0.0
    %139 = vmatpush2.msra.mxu0 0.0
    %140 = vmatprep.subr.mxu0 0.0
    %141 = vmatpush2.msra.mxu0 0.0
    %142 = vmatprep.subr.mxu0 0.0
    %143 = vmatpush2.msra.mxu0 0.0
    %144 = vmatprep.subr.mxu0 0.0
    %145 = vmatpush2.msra.mxu0 0.0
    %146 = vmatprep.subr.mxu0 0.0
    %147 = vmatpush2.msra.mxu0 0.0
    %148 = vmatprep.mubr.f32.mxu0 0.0
    %149 = vmatmul.mubr.f32.gmra.mxu0 %v60
    %v150 = vpop.f32.mrf.mxu0
    %v151 = vadd.f32 %v82, %v150
    %v152 = vpop.f32.mrf.mxu0
    %153 = vdwg.mxu0
    %v154 = vld [vmem:[#allocation7] sm:$0xff]
    %v155 = vld [vmem:[#allocation7 + $0x20] sm:$0xff]
    %v156 = vlaneseq
    %v157 = vshrl.u32 %v156, 7
    %v158 = vsub.s32 0, %v157
    %v159 = vrot.slane %v151, %v158
    %161 = vbcast.lane.b32.xlu0 %v159, 256
    %v162 = vpop.permute.xlu0 %161
    %v163 = vlaneseq
    %v164 = vshrl.u32 %v163, 7
    %v165 = vsub.s32 1, %v164
    %v166 = vrot.slane %v151, %v165
    %168 = vbcast.lane.b32.xlu0 %v166, 256
    %v169 = vpop.permute.xlu0 %168
    %v170 = vmul.f32 %v162, %v154
    %v171 = vmul.f32 %v169, %v155
    %vm172 = vcmask 523264
    %v173 = vsel %vm172, %v170, 0.0
    %v174 = vrot.slane %v173, 4
    %v175 = vadd.f32 %v173, %v174
    %v176 = vrot.slane %v175, 2
    %v177 = vadd.f32 %v175, %v176
    %v178 = vrot.slane %v177, 1
    %v179 = vadd.f32 %v177, %v178
    %v180 = vsel %vm172, %v171, 0.0
    %v181 = vrot.slane %v180, 4
    %v182 = vadd.f32 %v180, %v181
    %v183 = vrot.slane %v182, 2
    %v184 = vadd.f32 %v182, %v183
    %v185 = vrot.slane %v184, 1
    %v186 = vadd.f32 %v184, %v185
    %v187 = vadd.f32 %v179, 0.0
    %v188 = vadd.f32 %v186, 0.0
    %v189 = vld [vmem:[#allocation7 + $0x8] sm:$0xff]
    %v190 = vld [vmem:[#allocation7 + $0x28] sm:$0xff]
    %s192 = sor.u32 256, 8
    %193 = vbcast.lane.b32.xlu0 %v159, %s192
    %v194 = vpop.permute.xlu0 %193
    %s196 = sor.u32 256, 8
    %197 = vbcast.lane.b32.xlu0 %v166, %s196
    %v198 = vpop.permute.xlu0 %197
    %v199 = vmul.f32 %v194, %v189
    %v200 = vmul.f32 %v198, %v190
    %v201 = vsel %vm172, %v199, 0.0
    %v202 = vrot.slane %v201, 4
    %v203 = vadd.f32 %v201, %v202
    %v204 = vrot.slane %v203, 2
    %v205 = vadd.f32 %v203, %v204
    %v206 = vrot.slane %v205, 1
    %v207 = vadd.f32 %v205, %v206
    %v208 = vsel %vm172, %v200, 0.0
    %v209 = vrot.slane %v208, 4
    %v210 = vadd.f32 %v208, %v209
    %v211 = vrot.slane %v210, 2
    %v212 = vadd.f32 %v210, %v211
    %v213 = vrot.slane %v212, 1
    %v214 = vadd.f32 %v212, %v213
    %v215 = vadd.f32 %v187, %v207
    %v216 = vadd.f32 %v188, %v214
    %v217 = vld [vmem:[#allocation7 + $0x10] sm:$0xff]
    %v218 = vld [vmem:[#allocation7 + $0x30] sm:$0xff]
    %s220 = sor.u32 256, 16
    %221 = vbcast.lane.b32.xlu0 %v159, %s220
    %v222 = vpop.permute.xlu0 %221
    %s224 = sor.u32 256, 16
    %225 = vbcast.lane.b32.xlu0 %v166, %s224
    %v226 = vpop.permute.xlu0 %225
    %v227 = vmul.f32 %v222, %v217
    %v228 = vmul.f32 %v226, %v218
    %v229 = vsel %vm172, %v227, 0.0
    %v230 = vrot.slane %v229, 4
    %v231 = vadd.f32 %v229, %v230
    %v232 = vrot.slane %v231, 2
    %v233 = vadd.f32 %v231, %v232
    %v234 = vrot.slane %v233, 1
    %v235 = vadd.f32 %v233, %v234
    %v236 = vsel %vm172, %v228, 0.0
    %v237 = vrot.slane %v236, 4
    %v238 = vadd.f32 %v236, %v237
    %v239 = vrot.slane %v238, 2
    %v240 = vadd.f32 %v238, %v239
    %v241 = vrot.slane %v240, 1
    %v242 = vadd.f32 %v240, %v241
    %v243 = vadd.f32 %v215, %v235
    %v244 = vadd.f32 %v216, %v242
    %v245 = vld [vmem:[#allocation7 + $0x18] sm:$0xff]
    %v246 = vld [vmem:[#allocation7 + $0x38] sm:$0xff]
    %s248 = sor.u32 256, 24
    %249 = vbcast.lane.b32.xlu0 %v159, %s248
    %v250 = vpop.permute.xlu0 %249
    %s252 = sor.u32 256, 24
    %253 = vbcast.lane.b32.xlu0 %v166, %s252
    %v254 = vpop.permute.xlu0 %253
    %v255 = vmul.f32 %v250, %v245
    %v256 = vmul.f32 %v254, %v246
    %v257 = vsel %vm172, %v255, 0.0
    %v258 = vrot.slane %v257, 4
    %v259 = vadd.f32 %v257, %v258
    %v260 = vrot.slane %v259, 2
    %v261 = vadd.f32 %v259, %v260
    %v262 = vrot.slane %v261, 1
    %v263 = vadd.f32 %v261, %v262
    %v264 = vsel %vm172, %v256, 0.0
    %v265 = vrot.slane %v264, 4
    %v266 = vadd.f32 %v264, %v265
    %v267 = vrot.slane %v266, 2
    %v268 = vadd.f32 %v266, %v267
    %v269 = vrot.slane %v268, 1
    %v270 = vadd.f32 %v268, %v269
    %v271 = vadd.f32 %v243, %v263
    %v272 = vadd.f32 %v244, %v270
    %vm275 = vcmask 1041409
    %v276 = vsel %vm275, %v272, %v271
    %vm278 = vcmask 517120
    %v279 = vsel %vm278, %v276, -inf
    %280 = vmax.xlane.f32.xlu0 %v279
    %v281 = vpop.xlane.xlu0 %280
    %v283 = vrot.slane %v281, 1
    %v286 = vsub.f32 %v271, %v281
    %v287 = vsub.f32 %v272, %v283
    %v288 = vmul.f32 %v286, 1.442695
    %v289 = vpow.pop %v288
    %v290 = vmul.f32 %v287, 1.442695
    %v291 = vpow.pop %v290
    %v294 = vrot.slane %v291, 7
    %v295 = vsel %vm275, %v294, %v289
    %v297 = vsel %vm278, %v295, 0.0
    %298 = vadd.xlane.f32.xlu0 %v297
    %v299 = vpop.xlane.xlu0 %298
    %v300 = vrcp.pop %v299
    %v301 = vmul.f32 %v299, %v300
    %v302 = vsub.f32 2.0, %v301
    %v303 = vmul.f32 %v300, %v302
    %v305 = vrot.slane %v303, 1
    %v308 = vmul.f32 %v289, %v303
    %v309 = vmul.f32 %v291, %v305
    %v310 = vlaneseq
    %v311 = vshrl.u32 %v310, 7
    %v312 = vsub.s32 0, %v311
    %v313 = vrot.slane %v308, %v312
    %v314 = vlaneseq
    %v315 = vshrl.u32 %v314, 7
    %v316 = vsub.s32 0, %v315
    %v317 = vrot.slane %v309, %v316
    %v318 = vmul.f32 %v313, %v154
    %v319 = vmul.f32 %v317, %v155
    %v320 = vsel %vm172, %v318, 0.0
    %321 = vadd.xlane.f32.xlu0 %v320
    %v322 = vpop.xlane.xlu0 %321
    %v323 = vsel %vm172, %v319, 0.0
    %324 = vadd.xlane.f32.xlu0 %v323
    %v325 = vpop.xlane.xlu0 %324
    %v326 = vmul.f32 %v313, %v189
    %v327 = vmul.f32 %v317, %v190
    %v328 = vsel %vm172, %v326, 0.0
    %329 = vadd.xlane.f32.xlu0 %v328
    %v330 = vpop.xlane.xlu0 %329
    %v331 = vsel %vm172, %v327, 0.0
    %332 = vadd.xlane.f32.xlu0 %v331
    %v333 = vpop.xlane.xlu0 %332
    %v334 = vmul.f32 %v313, %v217
    %v335 = vmul.f32 %v317, %v218
    %v336 = vsel %vm172, %v334, 0.0
    %337 = vadd.xlane.f32.xlu0 %v336
    %v338 = vpop.xlane.xlu0 %337
    %v339 = vsel %vm172, %v335, 0.0
    %340 = vadd.xlane.f32.xlu0 %v339
    %v341 = vpop.xlane.xlu0 %340
    %v342 = vmul.f32 %v313, %v245
    %v343 = vmul.f32 %v317, %v246
    %v344 = vsel %vm172, %v342, 0.0
    %345 = vadd.xlane.f32.xlu0 %v344
    %v346 = vpop.xlane.xlu0 %345
    %v347 = vsel %vm172, %v343, 0.0
    %348 = vadd.xlane.f32.xlu0 %v347
    %v349 = vpop.xlane.xlu0 %348
    %v352 = vlaneseq
    %v353 = vand.u32 %v352, 127
    %v354 = vlaneseq
    %v355 = vshrl.u32 %v354, 7
    %v356 = vsub.s32 %v353, %v355
    %v357 = vrot.slane %v322, %v356
    %v358 = vlaneseq
    %v359 = vshrl.u32 %v358, 7
    %v360 = vsub.s32 %v353, %v359
    %v361 = vrot.slane %v325, %v360
    %v362 = vsel %vm275, %v361, %v357
    %v366 = vadd.s32 %v353, 4294967288
    %v367 = vlaneseq
    %v368 = vshrl.u32 %v367, 7
    %v369 = vsub.s32 %v366, %v368
    %v370 = vrot.slane %v330, %v369
    %v371 = vlaneseq
    %v372 = vshrl.u32 %v371, 7
    %v373 = vsub.s32 %v366, %v372
    %v374 = vrot.slane %v333, %v373
    %v375 = vsel %vm275, %v374, %v370
    %v379 = vadd.s32 %v353, 4294967280
    %v380 = vlaneseq
    %v381 = vshrl.u32 %v380, 7
    %v382 = vsub.s32 %v379, %v381
    %v383 = vrot.slane %v338, %v382
    %v384 = vlaneseq
    %v385 = vshrl.u32 %v384, 7
    %v386 = vsub.s32 %v379, %v385
    %v387 = vrot.slane %v341, %v386
    %v388 = vsel %vm275, %v387, %v383
    %v392 = vadd.s32 %v353, 4294967272
    %v393 = vlaneseq
    %v394 = vshrl.u32 %v393, 7
    %v395 = vsub.s32 %v392, %v394
    %v396 = vrot.slane %v346, %v395
    %v397 = vlaneseq
    %v398 = vshrl.u32 %v397, 7
    %v399 = vsub.s32 %v392, %v398
    %v400 = vrot.slane %v349, %v399
    %v401 = vsel %vm275, %v400, %v396
    %vm403 = vcmask 64512
    %v404 = vsel %vm403, %v362, %v375
    %vm405 = vcmask 130048
    %v406 = vsel %vm405, %v404, %v388
    %vm407 = vcmask 195584
    %v408 = vsel %vm407, %v406, %v401
    %vm409 = vcmask 254976
    %410 = vst.msk [vmem:[#allocation8] sm:$0x3] %vm409, %v408
    %v413 = vrot.slane %v309, 7
    %v414 = vsel %vm275, %v413, %v308
    %416 = vst.msk [vmem:[#allocation9] sm:$0x3] %vm278, %v414
    // Predicated region
    $region30: #{tpu_custom_call.1} parent=1 // pred_check
      _
    $region31: #{tpu_custom_call.1} parent=1 // pred_check_branch
      %418 = sbr.rel (0) target = $region33
    $region32: #{tpu_custom_call.1} parent=1 // pred_region
      %s420 = ssub.s32 32, 32
      %421 = vsyncadd [#allocation4], %s420
      %s423 = sshll.u32 [#allocation8], 4
      %s424 = int_to_ptr.vmem [resolvable:$true] %s423
      %426 = dma.vmem_to_hbm [thread:$0]  %s424, 32, %s4, [#allocation4]
    $region33: #{tpu_custom_call.1} parent=1 // pred_fallthru
      _
    // Predicated region
    $region34: #{tpu_custom_call.1} parent=1 // pred_check
      _
    $region35: #{tpu_custom_call.1} parent=1 // pred_check_branch
      %428 = sbr.rel (0) target = $region37
    $region36: #{tpu_custom_call.1} parent=1 // pred_region
      %s430 = ssub.s32 32, 32
      %431 = vsyncadd [#allocation10], %s430
      %s433 = sshll.u32 [#allocation9], 4
      %s434 = int_to_ptr.vmem [resolvable:$true] %s433
      %436 = dma.vmem_to_hbm [thread:$0]  %s434, 32, %s5, [#allocation10]
    $region37: #{tpu_custom_call.1} parent=1 // pred_fallthru
      _
    // Predicated region
    $region38: #{tpu_custom_call.1} parent=1 // pred_check
      _
    $region39: #{tpu_custom_call.1} parent=1 // pred_check_branch
      %438 = sbr.rel (0) target = $region41
    $region40: #{tpu_custom_call.1} parent=1 // pred_region
      %439 = dma.done [#allocation4], 32
    $region41: #{tpu_custom_call.1} parent=1 // pred_fallthru
      _
    // Predicated region
    $region42: #{tpu_custom_call.1} parent=1 // pred_check
      _
    $region43: #{tpu_custom_call.1} parent=1 // pred_check_branch
      %441 = sbr.rel (0) target = $region45
    $region44: #{tpu_custom_call.1} parent=1 // pred_region
      %442 = dma.done [#allocation10], 32
    $region45: #{tpu_custom_call.1} parent=1 // pred_fallthru
      _
    %443 = vsyncpa [#allocation3], 1
    %444 = vsyncpa [#allocation6], 1
    %445 = vsyncpa [#allocation4], 1
    %446 = vsyncpa [#allocation10], 1

</llo_original>
